<compile_context>
chip_gen: v5e
topology: v5e:2x2
jax: 0.10.0
libtpu: 0.0.40
codegen_flags: <defaults>
</compile_context>

<pallas_src>
import jax
import jax.numpy as jnp
from jax.experimental import pallas as pl
from jax.experimental.pallas import tpu as pltpu

NUM_RW_STEPS = 20   # num_rw_steps (BatchNorm1d features / Linear in_features)
DIM_PE = 24         # dim_pe       (Linear out_features)
BN_EPS = 1e-5

_LANE = 128
_SUBLANE = 8
_TILE_VMEM_BUDGET = 24 << 20    # padded, double-buffered in+out tile budget
_FUSED_VMEM_BUDGET = 20 << 20   # whole-batch-resident budget (incl. f32 temps)
_VMEM_LIMIT_CAP = 48 << 20      # stays under v7x's 64 MiB physical VMEM


def _round_up(v, m):
    return -(-int(v) // m) * m


def _auto_tile_rows(in_itemsize, out_itemsize):
    """Largest TM (multiple of 8) whose lane-padded, double-buffered in+out
    tiles fit the tile VMEM budget."""
    per_row = 2 * _LANE * (in_itemsize + out_itemsize)
    tm = (_TILE_VMEM_BUDGET // per_row) // _SUBLANE * _SUBLANE
    return max(int(tm), _SUBLANE)


# --------------------------------------------------------------------------
# Kernels
# --------------------------------------------------------------------------
def _fused_bn_linear_kernel(x_ref, g_ref, bta_ref, w_ref, b_ref, o_ref):
    """Single-HBM-read path: in-kernel batch stats + BN + Linear.
       x_ref: [N, S] native dtype; g_ref/bta_ref: [1, S] f32;
       w_ref: [S, D] f32; b_ref: [1, D] f32; o_ref: [N, D]."""
    x = x_ref[...].astype(jnp.float32)                       # [N, S]
    inv_n = jnp.float32(1.0 / x.shape[0])
    mean = jnp.sum(x, axis=0, keepdims=True) * inv_n          # [1, S]
    ex2 = jnp.sum(x * x, axis=0, keepdims=True) * inv_n       # [1, S]
    var = jnp.maximum(ex2 - mean * mean, 0.0)                 # biased variance
    scale = g_ref[...] * jax.lax.rsqrt(var + BN_EPS)          # [1, S]
    shift = bta_ref[...] - mean * scale                       # [1, S]
    x_bn = x * scale + shift                                  # [N, S]
    acc = jnp.dot(x_bn, w_ref[...], preferred_element_type=jnp.float32)
    o_ref[...] = (acc + b_ref[...]).astype(o_ref.dtype)


def _pe_linear_kernel(x_ref, w_ref, b_ref, o_ref):
    """Streaming path: x_tile @ W' + b' with BN folded into W'/b'.
       x_ref: [TM, S] native dtype; w_ref: [S, D] in x dtype (bf16 feeds the
       MXU natively); b_ref: [1, D] f32; o_ref: [TM, D]."""
    acc = jnp.dot(x_ref[...], w_ref[...], preferred_element_type=jnp.float32)
    # NOTE: D=24 < 128 lanes -> masked stores; only worth a feature-major
    # re-layout if the producer/consumer layout is negotiable (it is not here).
    o_ref[...] = (acc + b_ref[...]).astype(o_ref.dtype)


# --------------------------------------------------------------------------
# Wrapper
# --------------------------------------------------------------------------
def kernel_pe_node_encoder(pos_enc, bn_gamma, bn_beta, lin_w, lin_b, *,
                           tile_rows=None, out_dtype=None, use_fused=None):
    """pos_enc: [N, NUM_RW_STEPS] (f32 or bf16)
       bn_gamma/bn_beta: [NUM_RW_STEPS]  (BatchNorm1d affine params)
       lin_w: [DIM_PE, NUM_RW_STEPS] (PyTorch layout), lin_b: [DIM_PE]
       returns [N, DIM_PE] in `out_dtype` (defaults to pos_enc.dtype; pass
       bf16 explicitly to halve the output HBM traffic of this mem-bound op)."""
    n, s = pos_enc.shape
    assert s == NUM_RW_STEPS
    assert lin_w.shape == (DIM_PE, NUM_RW_STEPS)
    if out_dtype is None:
        out_dtype = pos_enc.dtype
    in_item = jnp.dtype(pos_enc.dtype).itemsize
    out_item = jnp.dtype(out_dtype).itemsize

    w_t = lin_w.astype(jnp.float32).T                      # [S, D]
    b32 = lin_b.astype(jnp.float32).reshape(1, DIM_PE)     # [1, D]
    g32 = bn_gamma.astype(jnp.float32)
    bt32 = bn_beta.astype(jnp.float32)

    # Lane-padded whole-batch footprint estimate for the fused path
    # (x native + ~3 f32 temporaries + output).
    fused_bytes = n * _LANE * (in_item + out_item + 3 * 4)
    if use_fused is None:
        use_fused = fused_bytes <= _FUSED_VMEM_BUDGET

    if use_fused:
        vmem_limit = int(min(_VMEM_LIMIT_CAP,
                             max(fused_bytes + (8 << 20), 16 << 20)))
        return pl.pallas_call(
            _fused_bn_linear_kernel,
            out_shape=jax.ShapeDtypeStruct((n, DIM_PE), out_dtype),
            compiler_params=pltpu.CompilerParams(vmem_limit_bytes=vmem_limit),
            cost_estimate=pl.CostEstimate(
                flops=2 * n * NUM_RW_STEPS * DIM_PE + 6 * n * NUM_RW_STEPS,
                transcendentals=NUM_RW_STEPS,
                bytes_accessed=(n * NUM_RW_STEPS * in_item
                                + n * DIM_PE * out_item
                                + NUM_RW_STEPS * (DIM_PE + 2) * 4
                                + DIM_PE * 4)),
        )(pos_enc, g32.reshape(1, NUM_RW_STEPS), bt32.reshape(1, NUM_RW_STEPS),
          w_t, b32)

    # ---- streaming tiled path ------------------------------------------------
    # Single-pass batch statistics (sum & sum-of-squares fuse into ONE HBM
    # read of x), biased variance as in training-mode BatchNorm1d.
    x32 = pos_enc.astype(jnp.float32)
    s1 = jnp.sum(x32, axis=0)
    s2 = jnp.sum(x32 * x32, axis=0)
    mean = s1 / n
    var = jnp.maximum(s2 / n - mean * mean, 0.0)
    scale = g32 * jax.lax.rsqrt(var + BN_EPS)               # [S]

    # Fold BN into the Linear layer.
    w_fold = w_t * scale[:, None]                                    # [S, D]
    b_fold = ((bt32 - mean * scale) @ w_t).reshape(1, DIM_PE) + b32  # [1, D]
    # Keep x in its native dtype for the MXU (bf16 x bf16 -> f32 accumulate);
    # bias stays f32 and is added after the matmul.
    w_kernel = w_fold.astype(pos_enc.dtype)

    if tile_rows is None:
        tile_rows = _auto_tile_rows(in_item, out_item)
    tile_rows = max(_round_up(tile_rows, _SUBLANE), _SUBLANE)

    if n <= tile_rows:
        # Keep >=2 grid steps when there is enough work so the "parallel"
        # row axis actually feeds both v7x TensorCores; tiny batches use a
        # single full-extent block (always layout-legal).
        tm = _round_up(pl.cdiv(n, 2), _SUBLANE) if n >= 2048 else n
    else:
        tm = tile_rows
    grid = (pl.cdiv(n, tm),)

    # Real (lane-padded, double-buffered) tile footprint -> scoped-VMEM limit.
    tile_bytes = 2 * tm * _LANE * (in_item + out_item)
    vmem_limit = int(min(_VMEM_LIMIT_CAP, max(tile_bytes + (8 << 20), 16 << 20)))

    return pl.pallas_call(
        _pe_linear_kernel,
        out_shape=jax.ShapeDtypeStruct((n, DIM_PE), out_dtype),
        grid_spec=pltpu.PrefetchScalarGridSpec(
            num_scalar_prefetch=0,
            grid=grid,
            in_specs=[
                pl.BlockSpec((tm, NUM_RW_STEPS), lambda i: (i, 0)),
                # Constant index maps: tiny parameter blocks stay resident
                # across grid steps (no per-step re-DMA).
                pl.BlockSpec((NUM_RW_STEPS, DIM_PE), lambda i: (0, 0)),
                pl.BlockSpec((1, DIM_PE), lambda i: (0, 0)),
            ],
            out_specs=pl.BlockSpec((tm, DIM_PE), lambda i: (i, 0)),
        ),
        compiler_params=pltpu.CompilerParams(
            dimension_semantics=("parallel",),   # independent row tiles
            vmem_limit_bytes=vmem_limit),
        cost_estimate=pl.CostEstimate(
            flops=2 * n * NUM_RW_STEPS * DIM_PE,
            transcendentals=0,
            bytes_accessed=(n * NUM_RW_STEPS * in_item
                            + n * DIM_PE * out_item
                            + NUM_RW_STEPS * DIM_PE * in_item
                            + DIM_PE * 4)),
    )(pos_enc, w_kernel, b_fold)


def _reference(pos_enc, bn_gamma, bn_beta, lin_w, lin_b):
    """Pure-JAX mirror of the PyTorch module (training-mode BatchNorm1d + Linear)."""
    x = pos_enc.astype(jnp.float32)
    mean = jnp.mean(x, axis=0, keepdims=True)
    var = jnp.mean((x - mean) ** 2, axis=0, keepdims=True)    # biased variance
    x_hat = (x - mean) / jnp.sqrt(var + BN_EPS)
    x_bn = x_hat * bn_gamma[None, :] + bn_beta[None, :]
    return x_bn @ lin_w.T + lin_b[None, :]


if __name__ == "__main__":
    key = jax.random.PRNGKey(0)
    k_x, k_g, k_b, k_w, k_lb = jax.random.split(key, 5)

    n_nodes = 24   # small "batch" of graph nodes

    # pos_enc: precomputed RWSE stats per node (random-walk landing probs).
    pos_enc = jax.random.uniform(k_x, (n_nodes, NUM_RW_STEPS), jnp.float32)

    # BatchNorm1d(num_rw_steps) parameters (PyTorch init gamma=1, beta=0;
    # perturbed deterministically so the affine part is exercised).
    bn_gamma = 1.0 + 0.1 * jax.random.normal(k_g, (NUM_RW_STEPS,), jnp.float32)
    bn_beta = 0.1 * jax.random.normal(k_b, (NUM_RW_STEPS,), jnp.float32)

    # nn.Linear(num_rw_steps, dim_pe): weight [DIM_PE, NUM_RW_STEPS], bias [DIM_PE]
    bound = 1.0 / jnp.sqrt(float(NUM_RW_STEPS))
    lin_w = jax.random.uniform(k_w, (DIM_PE, NUM_RW_STEPS), jnp.float32,
                               minval=-bound, maxval=bound)
    lin_b = jax.random.uniform(k_lb, (DIM_PE,), jnp.float32,
                               minval=-bound, maxval=bound)

    ref = _reference(pos_enc, bn_gamma, bn_beta, lin_w, lin_b)

    # 1) Fused single-HBM-read path (default for small N).
    out_fused = kernel_pe_node_encoder(pos_enc, bn_gamma, bn_beta, lin_w, lin_b)
    out_fused = jax.block_until_ready(out_fused)
    assert out_fused.shape == (n_nodes, DIM_PE)
    assert jnp.allclose(out_fused, ref, atol=1e-3, rtol=1e-3), "fused path mismatch"

    # 2) Streaming tiled path; tiny tile_rows forces a multi-tile grid so the
    #    pipelined / parallel row-tiling path is actually exercised.
    out_tiled = kernel_pe_node_encoder(pos_enc, bn_gamma, bn_beta, lin_w, lin_b,
                                       use_fused=False, tile_rows=8)
    out_tiled = jax.block_until_ready(out_tiled)
    assert out_tiled.shape == (n_nodes, DIM_PE)
    assert jnp.allclose(out_tiled, ref, atol=1e-3, rtol=1e-3), "tiled path mismatch"

    # TODO(synk): `pass_as_var` / concatenation of the PE onto node features is
    # handled by the surrounding GraphGPS model, not by this module's forward.
    print("KERNEL_OK")
</pallas_src>

<mosaic_0001>
module attributes {stable_mosaic.version = 11 : i64} {
  func.func @_fused_bn_linear_kernel(%arg0: memref<24x20xf32, #tpu.memory_space<vmem>>, %arg1: memref<1x20xf32, #tpu.memory_space<vmem>>, %arg2: memref<1x20xf32, #tpu.memory_space<vmem>>, %arg3: memref<20x24xf32, #tpu.memory_space<vmem>>, %arg4: memref<1x24xf32, #tpu.memory_space<vmem>>, %arg5: memref<24x24xf32, #tpu.memory_space<vmem>>) attributes {dimension_semantics = [], scalar_prefetch = 0 : i64, scratch_operands = 0 : i64, tpu.core_type = #tpu.core_type<tc>} {
    %c0 = arith.constant 0 : index
    %c0_0 = arith.constant 0 : index
    %0 = vector.load %arg0[%c0, %c0_0] : memref<24x20xf32, #tpu.memory_space<vmem>>, vector<24x20xf32>
    %cst = arith.constant dense<0.000000e+00> : vector<20xf32>
    %1 = vector.multi_reduction <add>, %0, %cst [0] : vector<24x20xf32> to vector<20xf32>
    %2 = vector.shape_cast %1 : vector<20xf32> to vector<1x20xf32>
    %cst_1 = arith.constant 0.0416666679 : f32
    %3 = vector.broadcast %cst_1 : f32 to vector<1x20xf32>
    %4 = arith.mulf %2, %3 : vector<1x20xf32>
    %5 = arith.mulf %0, %0 : vector<24x20xf32>
    %cst_2 = arith.constant dense<0.000000e+00> : vector<20xf32>
    %6 = vector.multi_reduction <add>, %5, %cst_2 [0] : vector<24x20xf32> to vector<20xf32>
    %7 = vector.shape_cast %6 : vector<20xf32> to vector<1x20xf32>
    %cst_3 = arith.constant 0.0416666679 : f32
    %8 = vector.broadcast %cst_3 : f32 to vector<1x20xf32>
    %9 = arith.mulf %7, %8 : vector<1x20xf32>
    %10 = arith.mulf %4, %4 : vector<1x20xf32>
    %11 = arith.subf %9, %10 : vector<1x20xf32>
    %cst_4 = arith.constant 0.000000e+00 : f32
    %12 = vector.broadcast %cst_4 : f32 to vector<1x20xf32>
    %13 = arith.maximumf %11, %12 : vector<1x20xf32>
    %c0_5 = arith.constant 0 : index
    %c0_6 = arith.constant 0 : index
    %14 = vector.load %arg1[%c0_5, %c0_6] : memref<1x20xf32, #tpu.memory_space<vmem>>, vector<1x20xf32>
    %cst_7 = arith.constant 9.99999974E-6 : f32
    %15 = vector.broadcast %cst_7 : f32 to vector<1x20xf32>
    %16 = arith.addf %13, %15 : vector<1x20xf32>
    %17 = math.rsqrt %16 : vector<1x20xf32>
    %18 = arith.mulf %14, %17 : vector<1x20xf32>
    %c0_8 = arith.constant 0 : index
    %c0_9 = arith.constant 0 : index
    %19 = vector.load %arg2[%c0_8, %c0_9] : memref<1x20xf32, #tpu.memory_space<vmem>>, vector<1x20xf32>
    %20 = arith.mulf %4, %18 : vector<1x20xf32>
    %21 = arith.subf %19, %20 : vector<1x20xf32>
    %22 = vector.broadcast %18 : vector<1x20xf32> to vector<24x20xf32>
    %23 = arith.mulf %0, %22 : vector<24x20xf32>
    %24 = vector.broadcast %21 : vector<1x20xf32> to vector<24x20xf32>
    %25 = arith.addf %23, %24 : vector<24x20xf32>
    %c0_10 = arith.constant 0 : index
    %c0_11 = arith.constant 0 : index
    %26 = vector.load %arg3[%c0_10, %c0_11] : memref<20x24xf32, #tpu.memory_space<vmem>>, vector<20x24xf32>
    %cst_12 = arith.constant dense<0.000000e+00> : vector<24x24xf32>
    %27 = tpu.matmul %25, %26, %cst_12 {dimension_numbers = #tpu.dot_dimension_numbers<[1], [0], [0], [1], [0, 0, 1, 1], [], []>} : vector<24x20xf32>, vector<20x24xf32>, vector<24x24xf32> -> vector<24x24xf32>
    %c0_13 = arith.constant 0 : index
    %c0_14 = arith.constant 0 : index
    %28 = vector.load %arg4[%c0_13, %c0_14] : memref<1x24xf32, #tpu.memory_space<vmem>>, vector<1x24xf32>
    %29 = vector.broadcast %28 : vector<1x24xf32> to vector<24x24xf32>
    %30 = arith.addf %27, %29 : vector<24x24xf32>
    %c0_15 = arith.constant 0 : index
    %c0_16 = arith.constant 0 : index
    %31 = vector.load %arg5[%c0_15, %c0_16] : memref<24x24xf32, #tpu.memory_space<vmem>>, vector<24x24xf32>
    tpu.vector_store %arg5[%c0_15, %c0_16], %30 {strides = array<i32>} : memref<24x24xf32, #tpu.memory_space<vmem>>, vector<24x24xf32>,
    return
  }
}

</mosaic_0001>

<llo_original>
// kernel: tpu_custom_call.1
$region0: #{tpu_custom_call.1}
  #allocation0 [shape = 'u32[]', space=smem, size = 0x4, offset = 0x4, fixed_abs, tag = 'smem constant byte address 0x4 - core index']
  #allocation1 [shape = 'u32[72,128]{1,0:T(1,128)}', space=vmem, size = 0x9000, scoped, tag = 'internal scratch']
  %s0 = inlined_call_operand.hbm [shape: f32[24,20], index: 0, kind: input, shape index: {}]
  %s1 = inlined_call_operand.hbm [shape: f32[1,20], index: 1, kind: input, shape index: {}]
  %s2 = inlined_call_operand.vmem [shape: f32[1,20], index: 2, kind: input, shape index: {}]
  %s3 = inlined_call_operand.hbm [shape: f32[20,24], index: 3, kind: input, shape index: {}]
  %s4 = inlined_call_operand.vmem [shape: f32[1,24], index: 4, kind: input, shape index: {}]
  %s5 = inlined_call_operand.hbm [shape: f32[24,24], index: 5, kind: output, shape index: {}]
  %s6 = sld [smem:[#allocation0]]
  $region42: #{tpu_custom_call.1} parent=0
    _
  %s8 = ssub.s32 1, %s6
  %s9 = scalar_select 0, %s8, %s6
  $region1: #{tpu_custom_call.1} parent=0
    #allocation2 [shape = 'u8[12288]{0}', space=vmem, size = 0x3000, scoped, tag = 'input window, operand 0, single buffered']
    #allocation3 [shape = 's32[1]{0}', space=sflag, size = 0x4, scoped, tag = 'scoped memory for tpu_custom_call.1']
    #allocation4 [shape = 's32[1]{0}', space=sflag, size = 0x4, scoped, tag = 'scoped memory for tpu_custom_call.1']
    #allocation5 [shape = 'u8[512]{0}', space=vmem, size = 0x400, scoped, tag = 'input window, operand 1, single buffered']
    #allocation6 [shape = 's32[1]{0}', space=sflag, size = 0x4, scoped, tag = 'scoped memory for tpu_custom_call.1']
    #allocation7 [shape = 'u8[12288]{0}', space=vmem, size = 0x3000, scoped, tag = 'input window, operand 3, single buffered']
    #allocation8 [shape = 'u8[12288]{0}', space=vmem, size = 0x3000, scoped, tag = 'output window, operand 0, single buffered']
    %10 = vsyncpa [#allocation3], 0
    %11 = vsyncpa [#allocation6], 0
    %12 = vsyncpa [#allocation4], 0
    // Predicated region
    $region2: #{tpu_custom_call.1} parent=1 // pred_check
      _
    $region3: #{tpu_custom_call.1} parent=1 // pred_check_branch
      %14 = sbr.rel (0) target = $region5
    $region4: #{tpu_custom_call.1} parent=1 // pred_region
      %16 = vsyncadd [#allocation3], 0
      %s17 = sshll.u32 %s0, 4
      %s18 = int_to_ptr.hbm [resolvable:$true] %s17
      %s19 = sshll.u32 [#allocation2], 4
      %s20 = int_to_ptr.vmem [resolvable:$true] %s19
      %25 = dma.hbm_to_vmem [thread:$0]  %s18, 384, %s20, [#allocation3], 128, 128, 8
    $region5: #{tpu_custom_call.1} parent=1 // pred_fallthru
      _
    // Predicated region
    $region6: #{tpu_custom_call.1} parent=1 // pred_check
      _
    $region7: #{tpu_custom_call.1} parent=1 // pred_check_branch
      %27 = sbr.rel (0) target = $region9
    $region8: #{tpu_custom_call.1} parent=1 // pred_region
      %29 = vsyncadd [#allocation6], 0
      %s31 = sshll.u32 %s1, 4
      %s32 = int_to_ptr.hbm [resolvable:$true] %s31
      %s33 = sshll.u32 [#allocation5], 4
      %s34 = int_to_ptr.vmem [resolvable:$true] %s33
      %36 = dma.hbm_to_vmem [thread:$0]  %s32, 16, %s34, [#allocation6]
    $region9: #{tpu_custom_call.1} parent=1 // pred_fallthru
      _
    // Predicated region
    $region10: #{tpu_custom_call.1} parent=1 // pred_check
      _
    $region11: #{tpu_custom_call.1} parent=1 // pred_check_branch
      %38 = sbr.rel (0) target = $region13
    $region12: #{tpu_custom_call.1} parent=1 // pred_region
      _
    $region13: #{tpu_custom_call.1} parent=1 // pred_fallthru
      _
    // Predicated region
    $region14: #{tpu_custom_call.1} parent=1 // pred_check
      _
    $region15: #{tpu_custom_call.1} parent=1 // pred_check_branch
      %40 = sbr.rel (0) target = $region17
    $region16: #{tpu_custom_call.1} parent=1 // pred_region
      %42 = vsyncadd [#allocation6], 0
      %s43 = sshll.u32 %s3, 4
      %s44 = int_to_ptr.hbm [resolvable:$true] %s43
      %s45 = sshll.u32 [#allocation7], 4
      %s46 = int_to_ptr.vmem [resolvable:$true] %s45
      %51 = dma.hbm_to_vmem [thread:$0]  %s44, 384, %s46, [#allocation6], 128, 128, 8
    $region17: #{tpu_custom_call.1} parent=1 // pred_fallthru
      _
    // Predicated region
    $region18: #{tpu_custom_call.1} parent=1 // pred_check
      _
    $region19: #{tpu_custom_call.1} parent=1 // pred_check_branch
      %53 = sbr.rel (0) target = $region21
    $region20: #{tpu_custom_call.1} parent=1 // pred_region
      _
    $region21: #{tpu_custom_call.1} parent=1 // pred_fallthru
      _
    // Predicated region
    $region22: #{tpu_custom_call.1} parent=1 // pred_check
      _
    $region23: #{tpu_custom_call.1} parent=1 // pred_check_branch
      %55 = sbr.rel (0) target = $region25
    $region24: #{tpu_custom_call.1} parent=1 // pred_region
      %57 = dma.done [#allocation3], 384
    $region25: #{tpu_custom_call.1} parent=1 // pred_fallthru
      _
    // Predicated region
    $region26: #{tpu_custom_call.1} parent=1 // pred_check
      _
    $region27: #{tpu_custom_call.1} parent=1 // pred_check_branch
      %59 = sbr.rel (0) target = $region29
    $region28: #{tpu_custom_call.1} parent=1 // pred_region
      %61 = dma.done [#allocation6], 16
    $region29: #{tpu_custom_call.1} parent=1 // pred_fallthru
      _
    // Predicated region
    $region30: #{tpu_custom_call.1} parent=1 // pred_check
      _
    $region31: #{tpu_custom_call.1} parent=1 // pred_check_branch
      %63 = sbr.rel (0) target = $region33
    $region32: #{tpu_custom_call.1} parent=1 // pred_region
      %65 = dma.done [#allocation6], 384
    $region33: #{tpu_custom_call.1} parent=1 // pred_fallthru
      _
    %v66 = vld [vmem:[#allocation2] sm:$0xff]
    %v67 = vld [vmem:[#allocation2 + $0x8] sm:$0xff]
    %v68 = vld [vmem:[#allocation2 + $0x10] sm:$0xff]
    %vm69 = vcmask 162816
    %v70 = vsel %vm69, %v66, 0.0
    %v71 = vsel %vm69, %v67, 0.0
    %v72 = vadd.f32 %v70, %v71
    %v73 = vsel %vm69, %v68, 0.0
    %v74 = vadd.f32 %v72, %v73
    %v75 = vrot.slane %v74, 4
    %v76 = vadd.f32 %v74, %v75
    %v77 = vrot.slane %v76, 2
    %v78 = vadd.f32 %v76, %v77
    %v79 = vrot.slane %v78, 1
    %v80 = vadd.f32 %v78, %v79
    %v81 = vmul.f32 %v80, 0.041666668
    %v82 = vmul.f32 %v66, %v66
    %v83 = vmul.f32 %v67, %v67
    %v84 = vmul.f32 %v68, %v68
    %v85 = vsel %vm69, %v82, 0.0
    %v86 = vsel %vm69, %v83, 0.0
    %v87 = vadd.f32 %v85, %v86
    %v88 = vsel %vm69, %v84, 0.0
    %v89 = vadd.f32 %v87, %v88
    %v90 = vrot.slane %v89, 4
    %v91 = vadd.f32 %v89, %v90
    %v92 = vrot.slane %v91, 2
    %v93 = vadd.f32 %v91, %v92
    %v94 = vrot.slane %v93, 1
    %v95 = vadd.f32 %v93, %v94
    %v96 = vmul.f32 %v95, 0.041666668
    %v97 = vmul.f32 %v81, %v81
    %v98 = vsub.f32 %v96, %v97
    %v99 = vmax.f32 %v98, 0.0
    %v100 = vld [vmem:[#allocation5] sm:$0x1]
    %v101 = vadd.f32 %v99, 1e-05
    %v102 = vrsqrt.pop %v101
    %v103 = vmul.f32 %v102, %v101
    %v104 = vmul.f32 %v103, %v102
    %v105 = vmul.f32 0.5, %v104
    %v106 = vsub.f32 1.5, %v105
    %v107 = vmul.f32 %v102, %v106
    %vm108 = vweird.f32 %v101
    %vm109 = vweird.f32 %v102
    %vm110 = vmor %vm108, %vm109
    %v111 = vsel %vm110, %v102, %v107
    %v112 = vmul.f32 %v100, %v111
    %v113 = vld [vmem:[%s2] sm:$0x1]
    %v114 = vmul.f32 %v81, %v112
    %v115 = vsub.f32 %v113, %v114
    %v117 = vperm.slane %v112, 0
    %v119 = vmul.f32 %v66, %v117
    %v120 = vmul.f32 %v67, %v117
    %v121 = vmul.f32 %v68, %v117
    %v123 = vperm.slane %v115, 0
    %v125 = vadd.f32 %v119, %v123
    %v126 = vadd.f32 %v120, %v123
    %v127 = vadd.f32 %v121, %v123
    %v128 = vld [vmem:[#allocation7] sm:$0xff]
    %v129 = vld [vmem:[#allocation7 + $0x8] sm:$0xff]
    %v130 = vld [vmem:[#allocation7 + $0x10] sm:$0xf]
    %v131 = vld [vmem:[%s4] sm:$0x1]
    %v133 = vperm.slane %v131, 0
    %v136 = vsel %vm69, %v125, 0
    %v139 = vsel %vm69, %v126, 0
    %v142 = vsel %vm69, %v127, 0
    %vm144 = vcmask 1043456
    %v146 = vsel %vm144, %v130, 0
    %148 = vmatpush.msra.mxu0 0.0
    %149 = vmatpush.msra.mxu0 0.0
    %150 = vmatpush.msra.mxu0 0.0
    %151 = vmatpush.msra.mxu0 0.0
    %152 = vmatpush.msra.mxu0 0.0
    %153 = vmatpush.msra.mxu0 0.0
    %154 = vmatpush.msra.mxu0 0.0
    %155 = vmatpush.msra.mxu0 0.0
    %156 = vmatpush.msra.mxu0 0.0
    %157 = vmatpush.msra.mxu0 0.0
    %158 = vmatpush.msra.mxu0 0.0
    %159 = vmatpush.msra.mxu0 0.0
    %160 = vmatpush.msra.mxu0 0.0
    %161 = vmatpush.msra.mxu0 %v146
    %162 = vmatpush.msra.mxu0 %v129
    %163 = vmatpush.msra.mxu0 %v128
    %164 = vmatmul.f32.gmra.mxu0 %v136
    %v165 = vpop.f32.mrf.mxu0
    %v166 = vadd.f32 %v133, %v165
    %167 = vmatmul.f32.gmra.mxu0 %v139
    %v168 = vpop.f32.mrf.mxu0
    %v169 = vadd.f32 %v133, %v168
    %170 = vmatmul.f32.gmra.mxu0 %v142
    %v171 = vpop.f32.mrf.mxu0
    %v172 = vadd.f32 %v133, %v171
    %173 = vdwg.mxu0
    %vm174 = vcmask 195584
    %175 = vst.msk [vmem:[#allocation8] sm:$0xff] %vm174, %v166
    %176 = vst.msk [vmem:[#allocation8 + $0x8] sm:$0xff] %vm174, %v169
    %177 = vst.msk [vmem:[#allocation8 + $0x10] sm:$0xff] %vm174, %v172
    // Predicated region
    $region34: #{tpu_custom_call.1} parent=1 // pred_check
      _
    $region35: #{tpu_custom_call.1} parent=1 // pred_check_branch
      %179 = sbr.rel (0) target = $region37
    $region36: #{tpu_custom_call.1} parent=1 // pred_region
      %181 = vsyncadd [#allocation4], 0
      %s182 = sshll.u32 [#allocation8], 4
      %s183 = int_to_ptr.vmem [resolvable:$true] %s182
      %s184 = sshll.u32 %s5, 4
      %s185 = int_to_ptr.hbm [resolvable:$true] %s184
      %190 = dma.vmem_to_hbm [thread:$0]  %s183, 384, %s185, [#allocation4], 128, 128, 8
    $region37: #{tpu_custom_call.1} parent=1 // pred_fallthru
      _
    // Predicated region
    $region38: #{tpu_custom_call.1} parent=1 // pred_check
      _
    $region39: #{tpu_custom_call.1} parent=1 // pred_check_branch
      %192 = sbr.rel (0) target = $region41
    $region40: #{tpu_custom_call.1} parent=1 // pred_region
      %194 = dma.done [#allocation4], 384
    $region41: #{tpu_custom_call.1} parent=1 // pred_fallthru
      _
    %195 = vsyncpa [#allocation3], 1
    %196 = vsyncpa [#allocation6], 1
    %197 = vsyncpa [#allocation4], 1

</llo_original>
